<compile_context>
chip_gen: v6e
topology: v6e:2x2x1
jax: 0.10.0
libtpu: 0.0.40
codegen_flags: <defaults>
</compile_context>

<pallas_src>
import jax
import jax.numpy as jnp
from jax.experimental import pallas as pl
from jax.experimental.pallas import tpu as pltpu

# membership-function (lo, hi) per output row, row order = [false, partial, true]
_MF_LO = (0.0, 0.25, 0.70)
_MF_HI = (0.15, 0.50, 0.85)

_LANE = 128
_SUB = 8


def _fuzzy_kernel(scale_ref, bias_ref, x_ref, out_ref):
    # x_ref: (3, sb, 128) block; axis 0 = class, (sb, 128) tiles are fully dense.
    x = x_ref[...].astype(jnp.float32)
    x0 = x[0]          # class 0 (-> false score)
    x1 = x[1]          # class 1 (-> partial score)
    x2 = x[2]          # class 2 (-> true score)

    # 3-way softmax kept entirely on the VPU/EUP (no cross-lane reductions).
    m = jnp.maximum(x0, jnp.maximum(x1, x2))
    e0 = jnp.exp(x0 - m)
    e1 = jnp.exp(x1 - m)
    e2 = jnp.exp(x2 - m)
    inv = 1.0 / (e0 + e1 + e2)     # exact divide: hidden under DMA (HBM-bound kernel)

    # scores[row] = probs[row] * scale[row] + bias[row]  (membership affine + weight
    # folded host-side into per-row scalars living in SMEM via scalar prefetch).
    out_ref[0] = (e0 * inv * scale_ref[0] + bias_ref[0]).astype(out_ref.dtype)
    out_ref[1] = (e1 * inv * scale_ref[1] + bias_ref[1]).astype(out_ref.dtype)
    out_ref[2] = (e2 * inv * scale_ref[2] + bias_ref[2]).astype(out_ref.dtype)


def fuzzy_logic_layer_t(logits_t, weights, *, block_b=262144):
    """Lane-dense entry point.

    logits_t: (3, B) — class axis first (batch rides the lane axis), any float dtype.
    weights : (3,)   — PyTorch ordering (w0->true, w1->partial, w2->false).
    Returns (3, B) float32 fuzzy scores, row order [false, partial, true].
    """
    C, B = logits_t.shape
    assert C == 3, "FuzzyLogicLayer expects 3 classes"

    # Fold membership affine + weight into per-row scale/bias:
    #   score = (p - lo) / (hi - lo) * w  ==  p * (w/(hi-lo)) + (-lo*w/(hi-lo))
    w = weights.astype(jnp.float32)[::-1]              # row order [false, partial, true]
    lo = jnp.asarray(_MF_LO, dtype=jnp.float32)
    inv_den = 1.0 / (jnp.asarray(_MF_HI, jnp.float32) - lo)
    scale = inv_den * w                                 # (3,)
    bias = -lo * inv_den * w                            # (3,)

    # --- tiling over the batch (lane) axis, dense (3, sb, 128) layout ---------
    # Pad batch only to a multiple of 1024 (8 sublanes * 128 lanes), never to a
    # full tile, so padded DMA/compute stays negligible at large tile sizes.
    bp = pl.cdiv(B, _SUB * _LANE) * _SUB * _LANE
    sb_total = bp // _LANE                              # multiple of 8
    max_sb = max(_SUB, (block_b // _LANE) // _SUB * _SUB)
    nsteps = pl.cdiv(sb_total, max_sb)
    if nsteps == 1 and sb_total >= 2 * _SUB:
        nsteps = 2                                      # let both v7x TCs work
    sb = pl.cdiv(sb_total, nsteps * _SUB) * _SUB        # sublanes per grid step
    sb_padded = sb * nsteps
    bp = sb_padded * _LANE

    x = logits_t                                        # keep native dtype; cast in-kernel
    if bp != B:
        x = jnp.pad(x, ((0, 0), (0, bp - B)))           # zero logits -> finite outputs
    x = x.reshape(3, sb_padded, _LANE)

    # double-buffered in + out tiles, with a little headroom (capped, v7x-safe)
    need = 2 * 3 * sb * _LANE * (x.dtype.itemsize + 4)
    vmem_bytes = int(min(max(need + (2 << 20), 32 << 20), 48 << 20))

    out = pl.pallas_call(
        _fuzzy_kernel,
        out_shape=jax.ShapeDtypeStruct((3, sb_padded, _LANE), jnp.float32),
        grid_spec=pltpu.PrefetchScalarGridSpec(
            num_scalar_prefetch=2,                      # scale, bias -> SMEM scalars
            grid=(nsteps,),
            in_specs=[
                pl.BlockSpec((3, sb, _LANE), lambda i, s, b: (0, i, 0)),
            ],
            out_specs=pl.BlockSpec((3, sb, _LANE), lambda i, s, b: (0, i, 0)),
        ),
        compiler_params=pltpu.CompilerParams(
            dimension_semantics=("parallel",),
            vmem_limit_bytes=vmem_bytes),
    )(scale, bias, x)

    out = out.reshape(3, bp)
    return out if bp == B else out[:, :B]


def fuzzy_logic_layer(logits, weights, *, block_b=262144):
    """PyTorch-layout entry point: logits (B, 3) -> scores (B, 3) float32.

    The transposes below are layout plumbing only; for best end-to-end perf keep
    the producing layer's activations in (3, B) and call fuzzy_logic_layer_t.
    """
    B, C = logits.shape
    assert C == 3, "FuzzyLogicLayer expects 3 classes"
    out_t = fuzzy_logic_layer_t(jnp.transpose(logits), weights, block_b=block_b)
    return jnp.transpose(out_t)                         # (B, 3), cols [false, partial, true]


def _reference(logits, weights):
    probs = jax.nn.softmax(logits.astype(jnp.float32), axis=1)
    true_s = (probs[:, 2] - 0.70) / (0.85 - 0.70) * weights[0]
    part_s = (probs[:, 1] - 0.25) / (0.50 - 0.25) * weights[1]
    false_s = (probs[:, 0] - 0.00) / (0.15 - 0.00) * weights[2]
    return jnp.stack([false_s, part_s, true_s], axis=1)


if __name__ == "__main__":
    key = jax.random.PRNGKey(0)
    B = 256                                             # small demo batch
    logits = jax.random.normal(key, (B, 3), dtype=jnp.float32)

    # deterministic params, matching nn.Parameter(torch.tensor([10., 10., 10.]))
    weights = jnp.array([10.0, 10.0, 10.0], dtype=jnp.float32)

    out = fuzzy_logic_layer(logits, weights)
    out = jax.block_until_ready(out)

    ref = _reference(logits, weights)
    assert out.shape == (B, 3)
    assert out.dtype == jnp.float32
    assert jnp.allclose(out, ref, atol=1e-3, rtol=1e-4), "mismatch vs reference"

    print("KERNEL_OK")
</pallas_src>

<mosaic_0001>
module attributes {stable_mosaic.version = 11 : i64} {
  func.func @_fuzzy_kernel(%arg0: i32, %arg1: memref<3xf32, #tpu.memory_space<smem>>, %arg2: memref<3xf32, #tpu.memory_space<smem>>, %arg3: memref<3x8x128xf32, #tpu.memory_space<vmem>>, %arg4: memref<3x8x128xf32, #tpu.memory_space<vmem>>) attributes {dimension_semantics = [#tpu.dimension_semantics<parallel>], iteration_bounds = array<i64: 1>, scalar_prefetch = 2 : i64, scratch_operands = 0 : i64, tpu.core_type = #tpu.core_type<tc>, window_params = [{transform_indices = @transform_0, window_bounds = array<i64: 3, 8, 128>}, {transform_indices = @transform_1, window_bounds = array<i64: 3, 8, 128>}]} {
    %c0 = arith.constant 0 : index
    %c0_0 = arith.constant 0 : index
    %c0_1 = arith.constant 0 : index
    %0 = vector.load %arg3[%c0, %c0_0, %c0_1] : memref<3x8x128xf32, #tpu.memory_space<vmem>>, vector<3x8x128xf32>
    %1 = vector.extract_strided_slice %0 {offsets = [0, 0, 0], sizes = [1, 8, 128], strides = [1, 1, 1]} : vector<3x8x128xf32> to vector<1x8x128xf32>
    %2 = vector.shape_cast %1 : vector<1x8x128xf32> to vector<8x128xf32>
    %3 = vector.extract_strided_slice %0 {offsets = [1, 0, 0], sizes = [1, 8, 128], strides = [1, 1, 1]} : vector<3x8x128xf32> to vector<1x8x128xf32>
    %4 = vector.shape_cast %3 : vector<1x8x128xf32> to vector<8x128xf32>
    %5 = vector.extract_strided_slice %0 {offsets = [2, 0, 0], sizes = [1, 8, 128], strides = [1, 1, 1]} : vector<3x8x128xf32> to vector<1x8x128xf32>
    %6 = vector.shape_cast %5 : vector<1x8x128xf32> to vector<8x128xf32>
    %7 = arith.maximumf %4, %6 : vector<8x128xf32>
    %8 = arith.maximumf %2, %7 : vector<8x128xf32>
    %9 = arith.subf %2, %8 : vector<8x128xf32>
    %10 = math.exp %9 : vector<8x128xf32>
    %11 = arith.subf %4, %8 : vector<8x128xf32>
    %12 = math.exp %11 : vector<8x128xf32>
    %13 = arith.subf %6, %8 : vector<8x128xf32>
    %14 = math.exp %13 : vector<8x128xf32>
    %15 = arith.addf %10, %12 : vector<8x128xf32>
    %16 = arith.addf %15, %14 : vector<8x128xf32>
    %cst = arith.constant 1.000000e+00 : f32
    %17 = vector.broadcast %cst : f32 to vector<8x128xf32>
    %18 = arith.divf %17, %16 : vector<8x128xf32>
    %19 = arith.mulf %10, %18 : vector<8x128xf32>
    %c0_2 = arith.constant 0 : index
    %20 = memref.load %arg1[%c0_2] : memref<3xf32, #tpu.memory_space<smem>>
    %21 = vector.broadcast %20 : f32 to vector<8x128xf32>
    %22 = arith.mulf %19, %21 : vector<8x128xf32>
    %c0_3 = arith.constant 0 : index
    %23 = memref.load %arg2[%c0_3] : memref<3xf32, #tpu.memory_space<smem>>
    %24 = vector.broadcast %23 : f32 to vector<8x128xf32>
    %25 = arith.addf %22, %24 : vector<8x128xf32>
    %c0_4 = arith.constant 0 : index
    %c0_5 = arith.constant 0 : index
    %c0_6 = arith.constant 0 : index
    %26 = vector.load %arg4[%c0_4, %c0_5, %c0_6] : memref<3x8x128xf32, #tpu.memory_space<vmem>>, vector<1x8x128xf32>
    %27 = vector.shape_cast %26 : vector<1x8x128xf32> to vector<8x128xf32>
    %28 = vector.shape_cast %25 : vector<8x128xf32> to vector<1x8x128xf32>
    tpu.vector_store %arg4[%c0_4, %c0_5, %c0_6], %28 {strides = array<i32>} : memref<3x8x128xf32, #tpu.memory_space<vmem>>, vector<1x8x128xf32>,
    %29 = arith.mulf %12, %18 : vector<8x128xf32>
    %c1 = arith.constant 1 : index
    %30 = memref.load %arg1[%c1] : memref<3xf32, #tpu.memory_space<smem>>
    %31 = vector.broadcast %30 : f32 to vector<8x128xf32>
    %32 = arith.mulf %29, %31 : vector<8x128xf32>
    %c1_7 = arith.constant 1 : index
    %33 = memref.load %arg2[%c1_7] : memref<3xf32, #tpu.memory_space<smem>>
    %34 = vector.broadcast %33 : f32 to vector<8x128xf32>
    %35 = arith.addf %32, %34 : vector<8x128xf32>
    %c1_8 = arith.constant 1 : index
    %c0_9 = arith.constant 0 : index
    %c0_10 = arith.constant 0 : index
    %36 = vector.load %arg4[%c1_8, %c0_9, %c0_10] : memref<3x8x128xf32, #tpu.memory_space<vmem>>, vector<1x8x128xf32>
    %37 = vector.shape_cast %36 : vector<1x8x128xf32> to vector<8x128xf32>
    %38 = vector.shape_cast %35 : vector<8x128xf32> to vector<1x8x128xf32>
    tpu.vector_store %arg4[%c1_8, %c0_9, %c0_10], %38 {strides = array<i32>} : memref<3x8x128xf32, #tpu.memory_space<vmem>>, vector<1x8x128xf32>,
    %39 = arith.mulf %14, %18 : vector<8x128xf32>
    %c2 = arith.constant 2 : index
    %40 = memref.load %arg1[%c2] : memref<3xf32, #tpu.memory_space<smem>>
    %41 = vector.broadcast %40 : f32 to vector<8x128xf32>
    %42 = arith.mulf %39, %41 : vector<8x128xf32>
    %c2_11 = arith.constant 2 : index
    %43 = memref.load %arg2[%c2_11] : memref<3xf32, #tpu.memory_space<smem>>
    %44 = vector.broadcast %43 : f32 to vector<8x128xf32>
    %45 = arith.addf %42, %44 : vector<8x128xf32>
    %c2_12 = arith.constant 2 : index
    %c0_13 = arith.constant 0 : index
    %c0_14 = arith.constant 0 : index
    %46 = vector.load %arg4[%c2_12, %c0_13, %c0_14] : memref<3x8x128xf32, #tpu.memory_space<vmem>>, vector<1x8x128xf32>
    %47 = vector.shape_cast %46 : vector<1x8x128xf32> to vector<8x128xf32>
    %48 = vector.shape_cast %45 : vector<8x128xf32> to vector<1x8x128xf32>
    tpu.vector_store %arg4[%c2_12, %c0_13, %c0_14], %48 {strides = array<i32>} : memref<3x8x128xf32, #tpu.memory_space<vmem>>, vector<1x8x128xf32>,
    return
  }
  func.func @transform_0(%arg0: i32, %arg1: memref<3xf32, #tpu.memory_space<smem>>, %arg2: memref<3xf32, #tpu.memory_space<smem>>) -> (i32, i32, i32) {
    %c0_i32 = arith.constant 0 : i32
    %c0_i32_0 = arith.constant 0 : i32
    %c0_i32_1 = arith.constant 0 : i32
    return %c0_i32, %arg0, %c0_i32_0 : i32, i32, i32
  }
  func.func @transform_1(%arg0: i32, %arg1: memref<3xf32, #tpu.memory_space<smem>>, %arg2: memref<3xf32, #tpu.memory_space<smem>>) -> (i32, i32, i32) {
    %c0_i32 = arith.constant 0 : i32
    %c0_i32_0 = arith.constant 0 : i32
    %c0_i32_1 = arith.constant 0 : i32
    return %c0_i32, %arg0, %c0_i32_0 : i32, i32, i32
  }
}

</mosaic_0001>

<llo_original>
// kernel: tpu_custom_call.1
$region0: #{tpu_custom_call.1}
  #allocation0 [shape = 'u32[]', space=smem, size = 0x4, offset = 0x4, fixed_abs, tag = 'smem constant byte address 0x4 - core index']
  #allocation1 [shape = 'u32[144,128]{1,0:T(1,128)}', space=vmem, size = 0x12000, scoped, tag = 'internal scratch']
  #allocation2 [shape = 's32[1]{0}', space=sflag, size = 0x4, scoped, tag = 'scoped memory for tpu_custom_call.1']
  #allocation3 [shape = 'u8[512]{0}', space=smem, size = 0x200, scoped, tag = 'prefetched SMEM operand 0']
  #allocation4 [shape = 'u8[512]{0}', space=smem, size = 0x200, scoped, tag = 'prefetched SMEM operand 1']
  %s0 = inlined_call_operand.hbm [shape: f32[3], index: 0, kind: input, shape index: {}]
  %s1 = inlined_call_operand.vmem [shape: f32[3], index: 1, kind: input, shape index: {}]
  %s2 = inlined_call_operand.hbm [shape: f32[3,8,128], index: 2, kind: input, shape index: {}]
  %s3 = inlined_call_operand.hbm [shape: f32[3,8,128], index: 3, kind: output, shape index: {}]
  %s4 = sld [smem:[#allocation0]]
  $region18: #{tpu_custom_call.1} parent=0
    _
  %s6 = ssub.s32 1, %s4
  %s7 = scalar_select 0, %s6, %s4
  %9 = dma.hbm_to_smem %s0, 16, [#allocation3], [#allocation2]
  %s10 = sshll.u32 %s1, 4
  %s11 = int_to_ptr.vmem [resolvable:$true] %s10
  %13 = dma.vmem_to_smem %s11, 16, [#allocation4], [#allocation2]
  %14 = dma.done [#allocation2], 32
  %15 = sfence
  $region1: #{tpu_custom_call.1} parent=0
    #allocation5 [shape = 'u8[12288]{0}', space=vmem, size = 0x3000, scoped, tag = 'input window, operand 2, single buffered']
    #allocation6 [shape = 's32[1]{0}', space=sflag, size = 0x4, scoped, tag = 'scoped memory for tpu_custom_call.1']
    #allocation7 [shape = 's32[1]{0}', space=sflag, size = 0x4, scoped, tag = 'scoped memory for tpu_custom_call.1']
    #allocation8 [shape = 'u8[12288]{0}', space=vmem, size = 0x3000, scoped, tag = 'output window, operand 0, single buffered']
    %16 = vsyncpa [#allocation6], 0
    %17 = vsyncpa [#allocation7], 0
    // Predicated region
    $region2: #{tpu_custom_call.1} parent=1 // pred_check
      _
    $region3: #{tpu_custom_call.1} parent=1 // pred_check_branch
      %19 = sbr.rel (0) target = $region5
    $region4: #{tpu_custom_call.1} parent=1 // pred_region
      %s21 = ssub.s32 384, 384
      %22 = vsyncadd [#allocation6], %s21
      %s23 = sshll.u32 [#allocation5], 4
      %s24 = int_to_ptr.vmem [resolvable:$true] %s23
      %29 = dma.hbm_to_vmem [thread:$0]  %s2, 384, %s24, [#allocation6], 128, 128, 8
    $region5: #{tpu_custom_call.1} parent=1 // pred_fallthru
      _
    // Predicated region
    $region6: #{tpu_custom_call.1} parent=1 // pred_check
      _
    $region7: #{tpu_custom_call.1} parent=1 // pred_check_branch
      %31 = sbr.rel (0) target = $region9
    $region8: #{tpu_custom_call.1} parent=1 // pred_region
      %32 = dma.done [#allocation6], 384
    $region9: #{tpu_custom_call.1} parent=1 // pred_fallthru
      _
    %v33 = vld [vmem:[#allocation5] sm:$0xff]
    %v34 = vld [vmem:[#allocation5 + $0x8] sm:$0xff]
    %v35 = vld [vmem:[#allocation5 + $0x10] sm:$0xff]
    %v36 = vmax.f32 %v34, %v35
    %v37 = vmax.f32 %v33, %v36
    %v38 = vsub.f32 %v33, %v37
    %v39 = vmul.f32 %v38, 1.442695
    %v40 = vpow.pop %v39
    %v41 = vsub.f32 %v34, %v37
    %v42 = vmul.f32 %v41, 1.442695
    %v43 = vpow.pop %v42
    %v44 = vsub.f32 %v35, %v37
    %v45 = vmul.f32 %v44, 1.442695
    %v46 = vpow.pop %v45
    %v47 = vadd.f32 %v40, %v43
    %v48 = vadd.f32 %v47, %v46
    %v49 = vrcp.pop %v48
    %v50 = vmul.f32 1.0, %v49
    %v51 = vmul.f32 %v40, %v50
    %s52 = sld [smem:[#allocation3]]
    %v53 = vstv %s52
    %v54 = vmul.f32 %v51, %v53
    %s55 = sld [smem:[#allocation4]]
    %v56 = vstv %s55
    %v57 = vadd.f32 %v54, %v56
    %58 = vst [vmem:[#allocation8] sm:$0xff] %v57
    %v59 = vmul.f32 %v43, %v50
    %s60 = sld [smem:[#allocation3 + $0x1]]
    %v61 = vstv %s60
    %v62 = vmul.f32 %v59, %v61
    %s63 = sld [smem:[#allocation4 + $0x1]]
    %v64 = vstv %s63
    %v65 = vadd.f32 %v62, %v64
    %s66 = scalar_lea.vmem [#allocation8], 8
    %67 = vst [vmem:[%s66] sm:$0xff] %v65
    %v68 = vmul.f32 %v46, %v50
    %s69 = sld [smem:[#allocation3 + $0x2]]
    %v70 = vstv %s69
    %v71 = vmul.f32 %v68, %v70
    %s72 = sld [smem:[#allocation4 + $0x2]]
    %v73 = vstv %s72
    %v74 = vadd.f32 %v71, %v73
    %s75 = scalar_lea.vmem [#allocation8], 16
    %76 = vst [vmem:[%s75] sm:$0xff] %v74
    // Predicated region
    $region10: #{tpu_custom_call.1} parent=1 // pred_check
      _
    $region11: #{tpu_custom_call.1} parent=1 // pred_check_branch
      %78 = sbr.rel (0) target = $region13
    $region12: #{tpu_custom_call.1} parent=1 // pred_region
      %s80 = ssub.s32 384, 384
      %81 = vsyncadd [#allocation7], %s80
      %s82 = sshll.u32 [#allocation8], 4
      %s83 = int_to_ptr.vmem [resolvable:$true] %s82
      %88 = dma.vmem_to_hbm [thread:$0]  %s83, 384, %s3, [#allocation7], 128, 128, 8
    $region13: #{tpu_custom_call.1} parent=1 // pred_fallthru
      _
    // Predicated region
    $region14: #{tpu_custom_call.1} parent=1 // pred_check
      _
    $region15: #{tpu_custom_call.1} parent=1 // pred_check_branch
      %90 = sbr.rel (0) target = $region17
    $region16: #{tpu_custom_call.1} parent=1 // pred_region
      %91 = dma.done [#allocation7], 384
    $region17: #{tpu_custom_call.1} parent=1 // pred_fallthru
      _
    %92 = vsyncpa [#allocation6], 1
    %93 = vsyncpa [#allocation7], 1

</llo_original>
